<compile_context>
chip_gen: v7x
topology: tpu7x:2x2x1
jax: 0.10.0
libtpu: 0.0.40
codegen_flags: <defaults>
</compile_context>

<pallas_src>
import jax
import jax.numpy as jnp
from jax.experimental import pallas as pl
from jax.experimental.pallas import tpu as pltpu


def _round_up(x, m):
    return ((x + m - 1) // m) * m


def _vmem_capacity_bytes():
    try:
        return int(pltpu.get_tpu_info().vmem_capacity_bytes)
    except Exception:
        return 64 << 20  # conservative fallback: size for a v7x-like 64 MiB VMEM


def _make_kernel(tn, use_xbf_scratch):
    if use_xbf_scratch:
        def kernel(x_ref, w_ref, b_ref, o_ref, xbf_ref):
            # x_ref: (tm, D) f32, w_ref: (D, tn) bf16, b_ref: (1, tn) f32,
            # o_ref: (tm, tn), xbf_ref: (tm, D) bf16 scratch.
            # Cast the (tm, D) x band to bf16 once per row band (column axis is the
            # innermost "arbitrary" grid axis, so j == 0 runs first for every i).
            @pl.when(pl.program_id(1) == 0)
            def _():
                xbf_ref[...] = x_ref[...].astype(jnp.bfloat16)

            wx = jnp.dot(xbf_ref[...], w_ref[...],
                         preferred_element_type=jnp.float32) + b_ref[...]
            # sigmoid via EUP exp + approx reciprocal (both off the VALU slot).
            gates = pl.reciprocal(1.0 + jnp.exp(-jnp.maximum(wx, -80.0)), approx=True)
            # Re-read just the matching x columns (no full f32 x held live across dot).
            col0 = pl.multiple_of(pl.program_id(1) * tn, 128)
            o_ref[...] = (gates * x_ref[:, pl.ds(col0, tn)]).astype(o_ref.dtype)

        return kernel

    def kernel(x_ref, w_ref, b_ref, o_ref):
        wx = jnp.dot(x_ref[...].astype(jnp.bfloat16), w_ref[...],
                     preferred_element_type=jnp.float32) + b_ref[...]
        gates = pl.reciprocal(1.0 + jnp.exp(-jnp.maximum(wx, -80.0)), approx=True)
        o_ref[...] = (gates * x_ref[...]).astype(o_ref.dtype)

    return kernel


def context_gating(x2d, w_t, b, *, tm=None, tn=None, out_dtype=None):
    """x2d: (N, Dp) f32 with Dp % 128 == 0 (padded x columns must be 0);
    w_t: (Dp, Dp) = W.T (in x out); b: (1, Dp) f32."""
    N, D = x2d.shape
    assert D % 128 == 0, "pad the feature dim to a multiple of 128 before calling"
    assert w_t.shape == (D, D) and b.shape == (1, D)
    out_dtype = x2d.dtype if out_dtype is None else out_dtype
    out_isz = jnp.dtype(out_dtype).itemsize

    # One-time cast outside the kernel: feed the MXU its native bf16 weight.
    w_t = w_t.astype(jnp.bfloat16)

    # ---- generation-aware VMEM sizing ---------------------------------------------
    vmem_cap = _vmem_capacity_bytes()
    is_small_vmem = vmem_cap <= (96 << 20)          # v7x-like (64 MiB per TC)
    budget = int(0.75 * vmem_cap)                   # ~96 MiB v5e/v6e, ~48 MiB v7x
    limit_cap = min(int(0.85 * vmem_cap), vmem_cap - (8 << 20))

    # ---- column tile: halve from D (staying a 128-multiple divisor of D) while the
    # weight column tile alone would eat more than ~half the budget ------------------
    def _w_tile_bytes(t):
        return D * t * 2 if t == D else 2 * D * t * 2   # single- vs double-buffered

    if tn is None:
        tn = D
        while tn > 512 and tn % 256 == 0 and _w_tile_bytes(tn) > budget // 2:
            tn //= 2
    n_col_blocks = pl.cdiv(D, tn)
    assert tn % 128 == 0 and D % tn == 0
    use_xbf_scratch = n_col_blocks > 1

    slack = 4 << 20                                  # Mosaic internal-scratch headroom
    if n_col_blocks == 1:
        w_bytes, b_bytes = D * tn * 2, tn * 4        # single-buffered (Buffered(1))
    else:
        w_bytes, b_bytes = 2 * D * tn * 2, 2 * tn * 4

    def _row_bytes(t):
        return (2 * t * D * 4                        # double-buffered f32 x band
                + 2 * t * tn * out_isz               # double-buffered output tile
                + t * D * 2)                         # bf16 cast temp / scratch

    # ---- row tile -------------------------------------------------------------------
    n_row_pad = _round_up(N, 8)
    if tm is None:
        if N <= 8:
            tm = N                                   # tiny problem: one full block
        else:
            tm = 1024
            while tm > 8 and _row_bytes(tm) + w_bytes + b_bytes + slack > budget:
                tm //= 2
            tm = max(tm, 8)
            tm = min(tm, n_row_pad)
            if is_small_vmem:
                # v7x only: >= 2 row blocks so both TensorCores get work.
                tm = min(tm, max(8, _round_up((N + 1) // 2, 8)))

    grid = (pl.cdiv(N, tm), n_col_blocks)

    cost = pl.CostEstimate(
        flops=2 * N * D * D,
        transcendentals=2 * N * D,                   # exp + reciprocal per element
        bytes_accessed=N * D * 4 + N * D * out_isz + D * D * 2 + D * 4,
    )

    kernel = _make_kernel(tn, use_xbf_scratch)
    scratch = [pltpu.VMEM((tm, D), jnp.bfloat16)] if use_xbf_scratch else []
    dims = ("parallel", "parallel") if n_col_blocks == 1 else ("parallel", "arbitrary")

    def _build(single_buffer_const):
        if n_col_blocks == 1 and single_buffer_const:
            # Block index (0, 0) never changes -> single-buffer weight & bias.
            w_spec = pl.BlockSpec((D, tn), lambda i, j: (0, j),
                                  pipeline_mode=pl.Buffered(1))
            b_spec = pl.BlockSpec((1, tn), lambda i, j: (0, j),
                                  pipeline_mode=pl.Buffered(1))
            wb = D * tn * 2 + tn * 4
        else:
            w_spec = pl.BlockSpec((D, tn), lambda i, j: (0, j))
            b_spec = pl.BlockSpec((1, tn), lambda i, j: (0, j))
            wb = 2 * D * tn * 2 + 2 * tn * 4
        vmem_bytes = _row_bytes(tm) + wb + slack
        vmem_limit = int(min(max(vmem_bytes, 32 << 20), limit_cap))

        return pl.pallas_call(
            kernel,
            out_shape=jax.ShapeDtypeStruct((N, D), out_dtype),
            grid_spec=pltpu.PrefetchScalarGridSpec(
                num_scalar_prefetch=0,
                grid=grid,
                in_specs=[
                    # x row band, full feature width; constant over the column axis
                    # -> fetched once per row band and reused.
                    pl.BlockSpec((tm, D), lambda i, j: (i, 0)),
                    w_spec,
                    b_spec,
                ],
                out_specs=pl.BlockSpec((tm, tn), lambda i, j: (i, j)),
                scratch_shapes=scratch,
            ),
            compiler_params=pltpu.CompilerParams(
                dimension_semantics=dims,
                vmem_limit_bytes=vmem_limit,
            ),
            cost_estimate=cost,
        )

    try:
        return _build(True)(x2d, w_t, b)
    except Exception:
        # Fallback if this JAX build rejects pipeline_mode=pl.Buffered(1).
        return _build(False)(x2d, w_t, b)


class ContextGatingPallas:
    """Parameter init matching weights_init_kaiming:
    Linear weight -> kaiming_normal_(a=0, mode='fan_out') => std = sqrt(2 / fan_out)
    (fan_out == input_size for this square layer); bias -> 0.
    The weight is stored pre-transposed ((in, out)), zero-padded to a multiple of 128,
    and kept in bf16 so the kernel runs x @ W.T natively on the MXU.
    NOTE: matmul runs in bf16 (f32 accumulate) -> results deviate slightly from a
    pure-f32 PyTorch reference."""

    def __init__(self, input_size, key):
        self.input_size = input_size
        self.d_pad = _round_up(input_size, 128)
        std = (2.0 / input_size) ** 0.5
        # PyTorch Linear weight has shape (out_features, in_features).
        w = std * jax.random.normal(key, (input_size, input_size), dtype=jnp.float32)
        w_t = jnp.zeros((self.d_pad, self.d_pad), jnp.float32)
        w_t = w_t.at[:input_size, :input_size].set(w.T)          # (in, out), zero padded
        self.w_t = w_t.astype(jnp.bfloat16)
        self.b = jnp.zeros((1, self.d_pad), jnp.float32)

    def __call__(self, x, out_dtype=None):
        # x: (..., input_size) -> flatten leading dims, pad features to 128, run kernel.
        # Keep the column zero-padding: correctness of the padded region relies on
        # padded x columns being exactly 0.
        orig_shape = x.shape
        x2d = x.reshape(-1, self.input_size)
        if self.d_pad != self.input_size:
            x2d = jnp.pad(x2d, ((0, 0), (0, self.d_pad - self.input_size)))
        out = context_gating(x2d, self.w_t, self.b, out_dtype=out_dtype)
        if self.d_pad != self.input_size:
            out = out[:, :self.input_size]
        return out.reshape(orig_shape)


if __name__ == "__main__":
    key = jax.random.PRNGKey(0)
    k_param, k_x = jax.random.split(key)

    batch, seq, hidden = 2, 8, 32
    module = ContextGatingPallas(hidden, k_param)
    x = jax.random.normal(k_x, (batch, seq, hidden), dtype=jnp.float32)

    out = jax.block_until_ready(module(x))
    assert out.shape == x.shape

    # Reference 1: same mixed-precision matmul path (bf16 matmul, f32 epilogue,
    # exact sigmoid).  Kernel uses an approx-reciprocal sigmoid -> small extra error.
    x2d = x.reshape(-1, hidden)
    x2d_pad = jnp.pad(x2d, ((0, 0), (0, module.d_pad - hidden)))
    wx_ref = jnp.dot(x2d_pad.astype(jnp.bfloat16), module.w_t,
                     preferred_element_type=jnp.float32) + module.b
    ref_bf16 = (jax.nn.sigmoid(wx_ref) * x2d_pad)[:, :hidden].reshape(x.shape)
    assert jnp.allclose(out, ref_bf16, atol=2e-2, rtol=2e-2)

    # Reference 2: pure-f32 PyTorch-equivalent math -> loose check (bf16 weight quant).
    w_f32 = module.w_t[:hidden, :hidden].astype(jnp.float32)
    ref_f32 = jax.nn.sigmoid(x @ w_f32 + module.b[0, :hidden]) * x
    assert jnp.allclose(out, ref_f32, atol=5e-2, rtol=5e-2)

    print("KERNEL_OK")
</pallas_src>

<mosaic_0001>
module attributes {stable_mosaic.version = 11 : i64} {
  func.func @kernel(%arg0: i32, %arg1: i32, %arg2: memref<8x128xf32, #tpu.memory_space<vmem>>, %arg3: memref<128x128xbf16, #tpu.memory_space<vmem>>, %arg4: memref<1x128xf32, #tpu.memory_space<vmem>>, %arg5: memref<8x128xf32, #tpu.memory_space<vmem>>) attributes {dimension_semantics = [#tpu.dimension_semantics<parallel>, #tpu.dimension_semantics<parallel>], iteration_bounds = array<i64: 2, 1>, scalar_prefetch = 0 : i64, scratch_operands = 0 : i64, tpu.core_type = #tpu.core_type<tc>, window_params = [{transform_indices = @transform_0, window_bounds = array<i64: 8, 128>}, {pipeline_mode = #tpu.pipeline_mode<synchronous>, transform_indices = @transform_1, window_bounds = array<i64: 128, 128>}, {pipeline_mode = #tpu.pipeline_mode<synchronous>, transform_indices = @transform_2, window_bounds = array<i64: 1, 128>}, {transform_indices = @transform_3, window_bounds = array<i64: 8, 128>}]} {
    %c0 = arith.constant 0 : index
    %c0_0 = arith.constant 0 : index
    %0 = vector.load %arg2[%c0, %c0_0] : memref<8x128xf32, #tpu.memory_space<vmem>>, vector<8x128xf32>
    %1 = arith.truncf %0 : vector<8x128xf32> to vector<8x128xbf16>
    %c0_1 = arith.constant 0 : index
    %c0_2 = arith.constant 0 : index
    %2 = vector.load %arg3[%c0_1, %c0_2] : memref<128x128xbf16, #tpu.memory_space<vmem>>, vector<128x128xbf16>
    %cst = arith.constant dense<0.000000e+00> : vector<8x128xf32>
    %3 = tpu.matmul %1, %2, %cst {dimension_numbers = #tpu.dot_dimension_numbers<[1], [0], [0], [1], [0, 0, 1, 1], [], []>} : vector<8x128xbf16>, vector<128x128xbf16>, vector<8x128xf32> -> vector<8x128xf32>
    %c0_3 = arith.constant 0 : index
    %c0_4 = arith.constant 0 : index
    %4 = vector.load %arg4[%c0_3, %c0_4] : memref<1x128xf32, #tpu.memory_space<vmem>>, vector<1x128xf32>
    %5 = vector.broadcast %4 : vector<1x128xf32> to vector<8x128xf32>
    %6 = arith.addf %3, %5 : vector<8x128xf32>
    %cst_5 = arith.constant -8.000000e+01 : f32
    %7 = vector.broadcast %cst_5 : f32 to vector<8x128xf32>
    %8 = arith.maximumf %6, %7 : vector<8x128xf32>
    %cst_6 = arith.constant 0.000000e+00 : f32
    %9 = vector.broadcast %cst_6 : f32 to vector<8x128xf32>
    %10 = arith.subf %9, %8 : vector<8x128xf32>
    %11 = math.exp %10 : vector<8x128xf32>
    %cst_7 = arith.constant 1.000000e+00 : f32
    %12 = vector.broadcast %cst_7 : f32 to vector<8x128xf32>
    %13 = arith.addf %12, %11 : vector<8x128xf32>
    %14 = tpu.reciprocal %13 {approx = true} : vector<8x128xf32> -> vector<8x128xf32>
    %c0_8 = arith.constant 0 : index
    %c0_9 = arith.constant 0 : index
    %15 = vector.load %arg2[%c0_8, %c0_9] : memref<8x128xf32, #tpu.memory_space<vmem>>, vector<8x128xf32>
    %16 = arith.mulf %14, %15 : vector<8x128xf32>
    %c0_10 = arith.constant 0 : index
    %c0_11 = arith.constant 0 : index
    %17 = vector.load %arg5[%c0_10, %c0_11] : memref<8x128xf32, #tpu.memory_space<vmem>>, vector<8x128xf32>
    tpu.vector_store %arg5[%c0_10, %c0_11], %16 {strides = array<i32>} : memref<8x128xf32, #tpu.memory_space<vmem>>, vector<8x128xf32>,
    return
  }
  func.func @transform_0(%arg0: i32, %arg1: i32) -> (i32, i32) {
    %c0_i32 = arith.constant 0 : i32
    %c0_i32_0 = arith.constant 0 : i32
    return %arg0, %c0_i32 : i32, i32
  }
  func.func @transform_1(%arg0: i32, %arg1: i32) -> (i32, i32) {
    %c0_i32 = arith.constant 0 : i32
    %c0_i32_0 = arith.constant 0 : i32
    return %c0_i32, %arg1 : i32, i32
  }
  func.func @transform_2(%arg0: i32, %arg1: i32) -> (i32, i32) {
    %c0_i32 = arith.constant 0 : i32
    %c0_i32_0 = arith.constant 0 : i32
    return %c0_i32, %arg1 : i32, i32
  }
  func.func @transform_3(%arg0: i32, %arg1: i32) -> (i32, i32) {
    %c0_i32 = arith.constant 0 : i32
    return %arg0, %arg1 : i32, i32
  }
}

module attributes {stable_mosaic.version = 11 : i64} {
  func.func @kernel(%arg0: i32, %arg1: i32, %arg2: memref<8x128xf32, #tpu.memory_space<vmem>>, %arg3: memref<128x128xbf16, #tpu.memory_space<vmem>>, %arg4: memref<1x128xf32, #tpu.memory_space<vmem>>, %arg5: memref<8x128xf32, #tpu.memory_space<vmem>>) attributes {dimension_semantics = [#tpu.dimension_semantics<parallel>, #tpu.dimension_semantics<parallel>], iteration_bounds = array<i64: 2, 1>, scalar_prefetch = 0 : i64, scratch_operands = 0 : i64, tpu.core_type = #tpu.core_type<tc>, window_params = [{transform_indices = @transform_0, window_bounds = array<i64: 8, 128>}, {transform_indices = @transform_1, window_bounds = array<i64: 128, 128>}, {transform_indices = @transform_2, window_bounds = array<i64: 1, 128>}, {transform_indices = @transform_3, window_bounds = array<i64: 8, 128>}]} {
    %c0 = arith.constant 0 : index
    %c0_0 = arith.constant 0 : index
    %0 = vector.load %arg2[%c0, %c0_0] : memref<8x128xf32, #tpu.memory_space<vmem>>, vector<8x128xf32>
    %1 = arith.truncf %0 : vector<8x128xf32> to vector<8x128xbf16>
    %c0_1 = arith.constant 0 : index
    %c0_2 = arith.constant 0 : index
    %2 = vector.load %arg3[%c0_1, %c0_2] : memref<128x128xbf16, #tpu.memory_space<vmem>>, vector<128x128xbf16>
    %cst = arith.constant dense<0.000000e+00> : vector<8x128xf32>
    %3 = tpu.matmul %1, %2, %cst {dimension_numbers = #tpu.dot_dimension_numbers<[1], [0], [0], [1], [0, 0, 1, 1], [], []>} : vector<8x128xbf16>, vector<128x128xbf16>, vector<8x128xf32> -> vector<8x128xf32>
    %c0_3 = arith.constant 0 : index
    %c0_4 = arith.constant 0 : index
    %4 = vector.load %arg4[%c0_3, %c0_4] : memref<1x128xf32, #tpu.memory_space<vmem>>, vector<1x128xf32>
    %5 = vector.broadcast %4 : vector<1x128xf32> to vector<8x128xf32>
    %6 = arith.addf %3, %5 : vector<8x128xf32>
    %cst_5 = arith.constant -8.000000e+01 : f32
    %7 = vector.broadcast %cst_5 : f32 to vector<8x128xf32>
    %8 = arith.maximumf %6, %7 : vector<8x128xf32>
    %cst_6 = arith.constant 0.000000e+00 : f32
    %9 = vector.broadcast %cst_6 : f32 to vector<8x128xf32>
    %10 = arith.subf %9, %8 : vector<8x128xf32>
    %11 = math.exp %10 : vector<8x128xf32>
    %cst_7 = arith.constant 1.000000e+00 : f32
    %12 = vector.broadcast %cst_7 : f32 to vector<8x128xf32>
    %13 = arith.addf %12, %11 : vector<8x128xf32>
    %14 = tpu.reciprocal %13 {approx = true} : vector<8x128xf32> -> vector<8x128xf32>
    %c0_8 = arith.constant 0 : index
    %c0_9 = arith.constant 0 : index
    %15 = vector.load %arg2[%c0_8, %c0_9] : memref<8x128xf32, #tpu.memory_space<vmem>>, vector<8x128xf32>
    %16 = arith.mulf %14, %15 : vector<8x128xf32>
    %c0_10 = arith.constant 0 : index
    %c0_11 = arith.constant 0 : index
    %17 = vector.load %arg5[%c0_10, %c0_11] : memref<8x128xf32, #tpu.memory_space<vmem>>, vector<8x128xf32>
    tpu.vector_store %arg5[%c0_10, %c0_11], %16 {strides = array<i32>} : memref<8x128xf32, #tpu.memory_space<vmem>>, vector<8x128xf32>,
    return
  }
  func.func @transform_0(%arg0: i32, %arg1: i32) -> (i32, i32) {
    %c0_i32 = arith.constant 0 : i32
    %c0_i32_0 = arith.constant 0 : i32
    return %arg0, %c0_i32 : i32, i32
  }
  func.func @transform_1(%arg0: i32, %arg1: i32) -> (i32, i32) {
    %c0_i32 = arith.constant 0 : i32
    %c0_i32_0 = arith.constant 0 : i32
    return %c0_i32, %arg1 : i32, i32
  }
  func.func @transform_2(%arg0: i32, %arg1: i32) -> (i32, i32) {
    %c0_i32 = arith.constant 0 : i32
    %c0_i32_0 = arith.constant 0 : i32
    return %c0_i32, %arg1 : i32, i32
  }
  func.func @transform_3(%arg0: i32, %arg1: i32) -> (i32, i32) {
    %c0_i32 = arith.constant 0 : i32
    return %arg0, %arg1 : i32, i32
  }
}

</mosaic_0001>

<llo_original>
// kernel: tpu_custom_call.1
$region0: #{tpu_custom_call.1}
  #allocation0 [shape = 'u32[]', space=smem, size = 0x4, offset = 0x4, fixed_abs, tag = 'smem constant byte address 0x4 - core index']
  #allocation1 [shape = 'u32[144,128]{1,0:T(1,128)}', space=vmem, size = 0x12000, scoped, tag = 'internal scratch']
  %s0 = inlined_call_operand.hbm [shape: f32[16,128], index: 0, kind: input, shape index: {}]
  %s1 = inlined_call_operand.hbm [shape: bf16[128,128], index: 1, kind: input, shape index: {}]
  %s2 = inlined_call_operand.vmem [shape: f32[1,128], index: 2, kind: input, shape index: {}]
  %s3 = inlined_call_operand.hbm [shape: f32[16,128], index: 3, kind: output, shape index: {}]
  %s4 = sld [smem:[#allocation0]]
  $region53: #{tpu_custom_call.1} parent=0
    _
  %s6 = ssub.s32 1, %s4
  %s7 = scalar_select 0, %s6, %s4
  $region1: #{tpu_custom_call.1} parent=0
    #allocation2 [shape = 'u8[8192]{0}', space=vmem, size = 0x2000, scoped, tag = 'input window, operand 0']
    #allocation3 [shape = 's32[2]{0}', space=sflag, size = 0x8, scoped, tag = 'scoped memory for tpu_custom_call.1']
    #allocation4 [shape = 's32[2]{0}', space=sflag, size = 0x8, scoped, tag = 'scoped memory for tpu_custom_call.1']
    #allocation5 [shape = 'u8[32768]{0}', space=vmem, size = 0x8000, scoped, tag = 'input window, operand 1, single buffered']
    #allocation6 [shape = 's32[1]{0}', space=sflag, size = 0x4, scoped, tag = 'scoped memory for tpu_custom_call.1']
    #allocation7 [shape = 'u8[8192]{0}', space=vmem, size = 0x2000, scoped, tag = 'output window, operand 0']
    %8 = vsyncpa [#allocation3], 0
    %s9 = scalar_lea.sflag [#allocation3], 1
    %10 = vsyncpa %s9, 0
    %11 = vsyncpa [#allocation6], 0
    %12 = vsyncpa [#allocation4], 0
    %s13 = scalar_lea.sflag [#allocation4], 1
    %14 = vsyncpa %s13, 0
    loop: start=0, step=1, limit=4
    $region2: #{tpu_custom_call.1} parent=1 // loop_pre_header
      _
    $region3: #{tpu_custom_call.1} parent=1 // loop_header
      %s16 = sphi 0, %s20
      %p17 = scmp.ge.s32.totalorder %s16, 4
      %s23 = sphi 0, %s35
      %s24 = sphi 0, %s31
      %s25 = sphi 0, %s23
      %s26 = sphi 0, %s24
      %s27 = sphi 0, %s25
      %s28 = sphi 0, %s26
      %s38 = sphi 0, %s40
      %s41 = sphi 0, %s38
      %s42 = sphi 0, %s41
      %s58 = sphi 0, %s42
      %s64 = sphi 0, %s66
      %s67 = sphi 0, %s64
      %s68 = sphi 0, %s67
      %s84 = sphi 0, %s68
      %s90 = sphi 0, %s92
      %s93 = sphi 0, %s90
      %s94 = sphi 0, %s93
      %s110 = sphi 0, %s94
      %s118 = sphi 0, %s120
      %s121 = sphi 0, %s118
      %s122 = sphi 0, %s121
      %s138 = sphi 0, %s122
    $region4: #{tpu_custom_call.1} parent=1 // loop_header_branch
      %19 = sbr.rel (%p17) target = $region8
    $region5: #{tpu_custom_call.1} parent=1 // loop_body
      %s21 = ssub.s32 %s16, 1
      %s22 = ssub.s32 %s16, 2
      %s29 = sadd.s32 1, %s24
      %p30 = scmp.ge.s32.totalorder %s29, 1
      %s31 = scalar_select %p30, 0, %s29
      %s32 = sadd.s32 1, %s23
      %s33 = scalar_select %p30, %s32, %s23
      %p34 = scmp.ge.s32.totalorder %s33, 2
      %s35 = scalar_select %p34, 0, %s33
      %s36 = ssub.s32 %s23, %s35
      %p37 = scmp.eq.s32.totalorder %s36, 0
      %s39 = sadd.s32 %s38, 1
      %s40 = scalar_select %p37, %s38, %s39
      %p43 = pneg %p37
      %p44 = scmp.eq.s32.totalorder %s16, 1
      %p45 = por %p43, %p44
      %p46 = scmp.ne.s32.totalorder %s38, %s41
      %p47 = scmp.eq.s32.totalorder %s16, 0
      %p48 = por %p46, %p47
      %p49 = scmp.ne.s32.totalorder %s38, %s41
      %p50 = scmp.eq.s32.totalorder %s21, 1
      %p51 = por %p49, %p50
      %p52 = scmp.ne.s32.totalorder %s41, %s42
      %p53 = scmp.eq.s32.totalorder %s21, 0
      %p54 = por %p52, %p53
      %p55 = scmp.ne.s32.totalorder %s41, %s42
      %p56 = scmp.eq.s32.totalorder %s22, 1
      %p57 = por %p55, %p56
      %p59 = scmp.ne.s32.totalorder %s42, %s58
      %p60 = scmp.eq.s32.totalorder %s22, 0
      %p61 = por %p59, %p60
      %s62 = ssub.s32 %s24, %s31
      %p63 = scmp.eq.s32.totalorder %s62, 0
      %s65 = sadd.s32 %s64, 1
      %s66 = scalar_select %p63, %s64, %s65
      %p69 = pneg %p63
      %p70 = scmp.eq.s32.totalorder %s16, 1
      %p71 = por %p69, %p70
      %p72 = scmp.ne.s32.totalorder %s64, %s67
      %p73 = scmp.eq.s32.totalorder %s16, 0
      %p74 = por %p72, %p73
      %p75 = scmp.ne.s32.totalorder %s64, %s67
      %p76 = scmp.eq.s32.totalorder %s21, 1
      %p77 = por %p75, %p76
      %p78 = scmp.ne.s32.totalorder %s67, %s68
      %p79 = scmp.eq.s32.totalorder %s21, 0
      %p80 = por %p78, %p79
      %p81 = scmp.ne.s32.totalorder %s67, %s68
      %p82 = scmp.eq.s32.totalorder %s22, 1
      %p83 = por %p81, %p82
      %p85 = scmp.ne.s32.totalorder %s68, %s84
      %p86 = scmp.eq.s32.totalorder %s22, 0
      %p87 = por %p85, %p86
      %s88 = ssub.s32 %s24, %s31
      %p89 = scmp.eq.s32.totalorder %s88, 0
      %s91 = sadd.s32 %s90, 1
      %s92 = scalar_select %p89, %s90, %s91
      %p95 = pneg %p89
      %p96 = scmp.eq.s32.totalorder %s16, 1
      %p97 = por %p95, %p96
      %p98 = scmp.ne.s32.totalorder %s90, %s93
      %p99 = scmp.eq.s32.totalorder %s16, 0
      %p100 = por %p98, %p99
      %p101 = scmp.ne.s32.totalorder %s90, %s93
      %p102 = scmp.eq.s32.totalorder %s21, 1
      %p103 = por %p101, %p102
      %p104 = scmp.ne.s32.totalorder %s93, %s94
      %p105 = scmp.eq.s32.totalorder %s21, 0
      %p106 = por %p104, %p105
      %p107 = scmp.ne.s32.totalorder %s93, %s94
      %p108 = scmp.eq.s32.totalorder %s22, 1
      %p109 = por %p107, %p108
      %p111 = scmp.ne.s32.totalorder %s94, %s110
      %p112 = scmp.eq.s32.totalorder %s22, 0
      %p113 = por %p111, %p112
      %s114 = ssub.s32 %s23, %s35
      %s115 = ssub.s32 %s24, %s31
      %s116 = sor.u32 %s114, %s115
      %p117 = scmp.eq.s32.totalorder %s116, 0
      %s119 = sadd.s32 %s118, 1
      %s120 = scalar_select %p117, %s118, %s119
      %p123 = pneg %p117
      %p124 = scmp.eq.s32.totalorder %s16, 1
      %p125 = por %p123, %p124
      %p126 = scmp.ne.s32.totalorder %s118, %s121
      %p127 = scmp.eq.s32.totalorder %s16, 0
      %p128 = por %p126, %p127
      %p129 = scmp.ne.s32.totalorder %s118, %s121
      %p130 = scmp.eq.s32.totalorder %s21, 1
      %p131 = por %p129, %p130
      %p132 = scmp.ne.s32.totalorder %s121, %s122
      %p133 = scmp.eq.s32.totalorder %s21, 0
      %p134 = por %p132, %p133
      %p135 = scmp.ne.s32.totalorder %s121, %s122
      %p136 = scmp.eq.s32.totalorder %s22, 1
      %p137 = por %p135, %p136
      %p139 = scmp.ne.s32.totalorder %s122, %s138
      %p140 = scmp.eq.s32.totalorder %s22, 0
      %p141 = por %p139, %p140
      %p142 = scmp.le.s32.totalorder 1, %s16
      %p143 = scmp.lt.s32.totalorder %s16, 3
      %p144 = pnand %p142, %p143
      %p145 = pneg %p144
      // Predicated region
      $region9: #{tpu_custom_call.1} parent=5 // pred_check
        _
      $region10: #{tpu_custom_call.1} parent=5 // pred_check_branch
        %147 = sbr.rel (%p144) target = $region12
      $region11: #{tpu_custom_call.1} parent=5 // pred_region
        %s148 = ssub.s32 %s16, 1
        // Predicated region
        $region13: #{tpu_custom_call.1} parent=11 // pred_check
          %p149 = pneg %p80
        $region14: #{tpu_custom_call.1} parent=11 // pred_check_branch
          %151 = sbr.rel (%p149) target = $region16
        $region15: #{tpu_custom_call.1} parent=11 // pred_region
          %s153 = ssub.s32 1024, 1024
          %154 = vsyncadd [#allocation6], %s153
          %s155 = smul.addr %s26, 64
          %s156 = scalar_lea.hbm %s1, %s155
          %s157 = sshll.u32 [#allocation5], 4
          %s158 = int_to_ptr.vmem [resolvable:$true] %s157
          %163 = dma.hbm_to_vmem [thread:$0]  %s156, 1024, %s158, [#allocation6], 64, 64, 4
        $region16: #{tpu_custom_call.1} parent=11 // pred_fallthru
          _
        // Predicated region
        $region17: #{tpu_custom_call.1} parent=11 // pred_check
          %p164 = pneg %p106
        $region18: #{tpu_custom_call.1} parent=11 // pred_check_branch
          %166 = sbr.rel (%p164) target = $region20
        $region19: #{tpu_custom_call.1} parent=11 // pred_region
          %p167 = scmp.lt.s32.totalorder %s26, 0
          %s168 = scalar_select %p167, %s26, 0
          %s169 = scalar_lea.vmem %s2, %s168
        $region20: #{tpu_custom_call.1} parent=11 // pred_fallthru
          _
      $region12: #{tpu_custom_call.1} parent=5 // pred_fallthru
        _
      %p170 = scmp.lt.s32.totalorder %s16, 2
      // Predicated region
      $region21: #{tpu_custom_call.1} parent=5 // pred_check
        %p171 = pneg %p170
      $region22: #{tpu_custom_call.1} parent=5 // pred_check_branch
        %173 = sbr.rel (%p171) target = $region24
      $region23: #{tpu_custom_call.1} parent=5 // pred_region
        // Predicated region
        $region25: #{tpu_custom_call.1} parent=23 // pred_check
          %p174 = pneg %p48
        $region26: #{tpu_custom_call.1} parent=23 // pred_check_branch
          %176 = sbr.rel (%p174) target = $region28
        $region27: #{tpu_custom_call.1} parent=23 // pred_region
          %s177 = sand.u32 %s38, 1
          %s178 = scalar_lea.sflag [#allocation3], %s177
          %s179 = sand.u32 %s38, 1
          %s180 = smul.addr %s179, 8
          %s181 = scalar_lea.vmem [#allocation2], %s180
          %s183 = ssub.s32 128, 128
          %184 = vsyncadd %s178, %s183
          %s185 = smul.addr %s23, 128
          %s186 = scalar_lea.hbm %s0, %s185
          %s188 = sshll.u32 %s181, 4
          %s189 = int_to_ptr.vmem [resolvable:$true] %s188
          %191 = dma.hbm_to_vmem [thread:$0]  %s186, 128, %s189, %s178
        $region28: #{tpu_custom_call.1} parent=23 // pred_fallthru
          _
      $region24: #{tpu_custom_call.1} parent=5 // pred_fallthru
        _
      %p192 = scmp.le.s32.totalorder 1, %s16
      %p193 = scmp.lt.s32.totalorder %s16, 3
      %p194 = pnand %p192, %p193
      %p195 = pneg %p194
      // Predicated region
      $region29: #{tpu_custom_call.1} parent=5 // pred_check
        _
      $region30: #{tpu_custom_call.1} parent=5 // pred_check_branch
        %197 = sbr.rel (%p194) target = $region32
      $region31: #{tpu_custom_call.1} parent=5 // pred_region
        %s198 = ssub.s32 %s16, 1
        %s199 = sand.u32 %s41, 1
        %s200 = scalar_lea.sflag [#allocation3], %s199
        %s201 = sand.u32 %s41, 1
        %s202 = smul.addr %s201, 8
        %s203 = scalar_lea.vmem [#allocation2], %s202
        // Predicated region
        $region33: #{tpu_custom_call.1} parent=31 // pred_check
          %p204 = pneg %p54
        $region34: #{tpu_custom_call.1} parent=31 // pred_check_branch
          %206 = sbr.rel (%p204) target = $region36
        $region35: #{tpu_custom_call.1} parent=31 // pred_region
          %207 = dma.done %s200, 128
        $region36: #{tpu_custom_call.1} parent=31 // pred_fallthru
          _
        // Predicated region
        $region37: #{tpu_custom_call.1} parent=31 // pred_check
          %p208 = pneg %p80
        $region38: #{tpu_custom_call.1} parent=31 // pred_check_branch
          %210 = sbr.rel (%p208) target = $region40
        $region39: #{tpu_custom_call.1} parent=31 // pred_region
          %211 = dma.done [#allocation6], 1024
        $region40: #{tpu_custom_call.1} parent=31 // pred_fallthru
          _
        %s212 = sand.u32 %s41, 1
        %s213 = scalar_lea.sflag [#allocation3], %s212
        %s214 = sand.u32 %s41, 1
        %s215 = smul.addr %s214, 8
        %s216 = scalar_lea.vmem [#allocation2], %s215
        %p217 = pneg %p54
        %p218 = pneg %p51
        %p219 = pneg %p80
        %p220 = pneg %p77
        %p221 = scmp.lt.s32.totalorder %s26, 0
        %s222 = scalar_select %p221, %s26, 0
        %s223 = scalar_lea.vmem %s2, %s222
        %p224 = pneg %p106
        %p225 = pneg %p103
        %p226 = pneg %p134
        %p227 = pneg %p131
        %s228 = sand.u32 %s121, 1
        %s229 = scalar_lea.sflag [#allocation4], %s228
        %s230 = sand.u32 %s121, 1
        %s231 = smul.addr %s230, 8
        %s232 = scalar_lea.vmem [#allocation7], %s231
        %p233 = scmp.lt.s32.totalorder %s26, 0
        %s234 = scalar_select %p233, %s26, 0
        %s235 = scalar_lea.vmem %s2, %s234
        %v237 = vld [vmem:[%s203] sm:$0xff]
        %v238 = vpack.c.bf16 %v237, %v237
        %v239 = vld [vmem:[#allocation5] sm:$0xf]
        %v240 = vld [vmem:[#allocation5 + $0x4] sm:$0xf]
        %v241 = vld [vmem:[#allocation5 + $0x8] sm:$0xf]
        %v242 = vld [vmem:[#allocation5 + $0xc] sm:$0xf]
        %v243 = vld [vmem:[#allocation5 + $0x10] sm:$0xf]
        %v244 = vld [vmem:[#allocation5 + $0x14] sm:$0xf]
        %v245 = vld [vmem:[#allocation5 + $0x18] sm:$0xf]
        %v246 = vld [vmem:[#allocation5 + $0x1c] sm:$0xf]
        %v247 = vld [vmem:[#allocation5 + $0x20] sm:$0xf]
        %v248 = vld [vmem:[#allocation5 + $0x24] sm:$0xf]
        %v249 = vld [vmem:[#allocation5 + $0x28] sm:$0xf]
        %v250 = vld [vmem:[#allocation5 + $0x2c] sm:$0xf]
        %v251 = vld [vmem:[#allocation5 + $0x30] sm:$0xf]
        %v252 = vld [vmem:[#allocation5 + $0x34] sm:$0xf]
        %v253 = vld [vmem:[#allocation5 + $0x38] sm:$0xf]
        %v254 = vld [vmem:[#allocation5 + $0x3c] sm:$0xf]
        %v255 = vld [vmem:[%s235] sm:$0x1]
        %v257 = vlaneseq
        %v258 = vshrl.u32 %v257, 7
        %v259 = vsub.s32 0, %v258
        %v260 = vrot.slane %v255, %v259
        %v278 = vunpack.c.l.b16 %v239
        %v279 = vunpack.c.l.b16 %v240
        %v280 = vunpack.c.l.b16 %v241
        %v281 = vunpack.c.l.b16 %v242
        %v282 = vunpack.c.l.b16 %v243
        %v283 = vunpack.c.l.b16 %v244
        %v284 = vunpack.c.l.b16 %v245
        %v285 = vunpack.c.l.b16 %v246
        %v286 = vunpack.c.l.b16 %v247
        %v287 = vunpack.c.l.b16 %v248
        %v288 = vunpack.c.l.b16 %v249
        %v289 = vunpack.c.l.b16 %v250
        %v290 = vunpack.c.l.b16 %v251
        %v291 = vunpack.c.l.b16 %v252
        %v292 = vunpack.c.l.b16 %v253
        %v293 = vunpack.c.l.b16 %v254
        %v294 = vpack.c.b16 %v279, %v278
        %v295 = vpack.c.b16 %v281, %v280
        %v296 = vpack.c.b16 %v283, %v282
        %v297 = vpack.c.b16 %v285, %v284
        %v298 = vpack.c.b16 %v287, %v286
        %v299 = vpack.c.b16 %v289, %v288
        %v300 = vpack.c.b16 %v291, %v290
        %v301 = vpack.c.b16 %v293, %v292
        %310 = vmatprep.subr.bf16.mxu0 0
        %311 = vmatpush1.bf16.msra.mxu0 %v294
        %312 = vmatprep.subr.bf16.mxu0 0
        %313 = vmatpush1.bf16.msra.mxu0 %v295
        %314 = vmatprep.subr.bf16.mxu0 0
        %315 = vmatpush1.bf16.msra.mxu0 %v296
        %316 = vmatprep.subr.bf16.mxu0 0
        %317 = vmatpush1.bf16.msra.mxu0 %v297
        %318 = vmatprep.subr.bf16.mxu0 0
        %319 = vmatpush1.bf16.msra.mxu0 %v298
        %320 = vmatprep.subr.bf16.mxu0 0
        %321 = vmatpush1.bf16.msra.mxu0 %v299
        %322 = vmatprep.subr.bf16.mxu0 0
        %323 = vmatpush1.bf16.msra.mxu0 %v300
        %324 = vmatprep.subr.bf16.mxu0 0
        %325 = vmatpush1.bf16.msra.mxu0 %v301
        %326 = vmatprep.subr.bf16.mxu0 0
        %327 = vmatpush1.bf16.msra.mxu0 0
        %328 = vmatprep.subr.bf16.mxu0 0
        %329 = vmatpush1.bf16.msra.mxu0 0
        %330 = vmatprep.subr.bf16.mxu0 0
        %331 = vmatpush1.bf16.msra.mxu0 0
        %332 = vmatprep.subr.bf16.mxu0 0
        %333 = vmatpush1.bf16.msra.mxu0 0
        %334 = vmatprep.subr.bf16.mxu0 0
        %335 = vmatpush1.bf16.msra.mxu0 0
        %336 = vmatprep.subr.bf16.mxu0 0
        %337 = vmatpush1.bf16.msra.mxu0 0
        %338 = vmatprep.subr.bf16.mxu0 0
        %339 = vmatpush1.bf16.msra.mxu0 0
        %340 = vmatprep.subr.bf16.mxu0 0
        %341 = vmatpush1.bf16.msra.mxu0 0
        %342 = vmatprep.mubr.bf16.mxu0 0
        %343 = vmatmul.mubr.bf16.gmra.mrb[0].mxu0 %v238
        %v344 = vpop.f32.mrb[0].mxu0
        %v345 = vadd.f32 %v260, %v344
        %v346 = vpop.f32.mrb[0].mxu0
        %v347 = vpop.f32.mrb[0].mxu0
        %v348 = vpop.f32.mrb[0].mxu0
        %349 = vdwg.mxu0
        %v350 = vmax.f32 %v345, -80.0
        %v351 = vsub.f32 0.0, %v350
        %v352 = vmul.f32 %v351, 1.442695
        %v353 = vpow.pop %v352
        %v354 = vadd.f32 %v353, 1.0
        %v355 = vrcp.pop %v354
        %v356 = vmul.f32 %v355, %v237
        %357 = vst [vmem:[%s232] sm:$0xff] %v356
        %s358 = sand.u32 %s121, 1
        %s359 = scalar_lea.sflag [#allocation4], %s358
        %s360 = sand.u32 %s121, 1
        %s361 = smul.addr %s360, 8
        %s362 = scalar_lea.vmem [#allocation7], %s361
        // Predicated region
        $region41: #{tpu_custom_call.1} parent=31 // pred_check
          %p363 = pneg %p131
        $region42: #{tpu_custom_call.1} parent=31 // pred_check_branch
          %365 = sbr.rel (%p363) target = $region44
        $region43: #{tpu_custom_call.1} parent=31 // pred_region
          %s367 = ssub.s32 128, 128
          %368 = vsyncadd %s359, %s367
          %s369 = sadd.s32 %s26, %s25
          %s370 = smul.addr %s369, 128
          %s371 = scalar_lea.hbm %s3, %s370
          %s373 = sshll.u32 %s362, 4
          %s374 = int_to_ptr.vmem [resolvable:$true] %s373
          %376 = dma.vmem_to_hbm [thread:$0]  %s374, 128, %s371, %s359
        $region44: #{tpu_custom_call.1} parent=31 // pred_fallthru
          _
      $region32: #{tpu_custom_call.1} parent=5 // pred_fallthru
        _
      %p377 = scmp.le.s32.totalorder 2, %s16
      // Predicated region
      $region45: #{tpu_custom_call.1} parent=5 // pred_check
        %p378 = pneg %p377
      $region46: #{tpu_custom_call.1} parent=5 // pred_check_branch
        %380 = sbr.rel (%p378) target = $region48
      $region47: #{tpu_custom_call.1} parent=5 // pred_region
        %s381 = ssub.s32 %s16, 2
        // Predicated region
        $region49: #{tpu_custom_call.1} parent=47 // pred_check
          %p382 = pneg %p137
        $region50: #{tpu_custom_call.1} parent=47 // pred_check_branch
          %384 = sbr.rel (%p382) target = $region52
        $region51: #{tpu_custom_call.1} parent=47 // pred_region
          %s385 = sand.u32 %s122, 1
          %s386 = scalar_lea.sflag [#allocation4], %s385
          %s387 = sand.u32 %s122, 1
          %s388 = smul.addr %s387, 8
          %s389 = scalar_lea.vmem [#allocation7], %s388
          %390 = dma.done %s386, 128
        $region52: #{tpu_custom_call.1} parent=47 // pred_fallthru
          _
      $region48: #{tpu_custom_call.1} parent=5 // pred_fallthru
        _
    $region6: #{tpu_custom_call.1} parent=1 // loop_footer
      %s20 = sadd.s32 1, %s16
    $region7: #{tpu_custom_call.1} parent=1 // loop_footer_branch
      %15 = sbr.rel target = $region3
    $region8: #{tpu_custom_call.1} parent=1 // loop_exit
      _
    %391 = vsyncpa [#allocation3], 1
    %s392 = scalar_lea.sflag [#allocation3], 1
    %393 = vsyncpa %s392, 1
    %394 = vsyncpa [#allocation6], 1
    %395 = vsyncpa [#allocation4], 1
    %s396 = scalar_lea.sflag [#allocation4], 1
    %397 = vsyncpa %s396, 1

// kernel: tpu_custom_call.1
$region0: #{tpu_custom_call.1}
  #allocation0 [shape = 'u32[]', space=smem, size = 0x4, offset = 0x4, fixed_abs, tag = 'smem constant byte address 0x4 - core index']
  #allocation1 [shape = 'u32[144,128]{1,0:T(1,128)}', space=vmem, size = 0x12000, scoped, tag = 'internal scratch']
  %s0 = inlined_call_operand.hbm [shape: f32[16,128], index: 0, kind: input, shape index: {}]
  %s1 = inlined_call_operand.hbm [shape: bf16[128,128], index: 1, kind: input, shape index: {}]
  %s2 = inlined_call_operand.vmem [shape: f32[1,128], index: 2, kind: input, shape index: {}]
  %s3 = inlined_call_operand.hbm [shape: f32[16,128], index: 3, kind: output, shape index: {}]
  %s4 = sld [smem:[#allocation0]]
  $region53: #{tpu_custom_call.1} parent=0
    _
  %s6 = ssub.s32 1, %s4
  %s7 = scalar_select 0, %s6, %s4
  $region1: #{tpu_custom_call.1} parent=0
    #allocation2 [shape = 'u8[8192]{0}', space=vmem, size = 0x2000, scoped, tag = 'input window, operand 0']
    #allocation3 [shape = 's32[2]{0}', space=sflag, size = 0x8, scoped, tag = 'scoped memory for tpu_custom_call.1']
    #allocation4 [shape = 's32[2]{0}', space=sflag, size = 0x8, scoped, tag = 'scoped memory for tpu_custom_call.1']
    #allocation5 [shape = 'u8[32768]{0}', space=vmem, size = 0x8000, scoped, tag = 'input window, operand 1, single buffered']
    #allocation6 [shape = 's32[1]{0}', space=sflag, size = 0x4, scoped, tag = 'scoped memory for tpu_custom_call.1']
    #allocation7 [shape = 'u8[8192]{0}', space=vmem, size = 0x2000, scoped, tag = 'output window, operand 0']
    %8 = vsyncpa [#allocation3], 0
    %s9 = scalar_lea.sflag [#allocation3], 1
    %10 = vsyncpa %s9, 0
    %11 = vsyncpa [#allocation6], 0
    %12 = vsyncpa [#allocation4], 0
    %s13 = scalar_lea.sflag [#allocation4], 1
    %14 = vsyncpa %s13, 0
    loop: start=0, step=1, limit=4
    $region2: #{tpu_custom_call.1} parent=1 // loop_pre_header
      _
    $region3: #{tpu_custom_call.1} parent=1 // loop_header
      %s16 = sphi 0, %s20
      %p17 = scmp.ge.s32.totalorder %s16, 4
      %s23 = sphi 0, %s35
      %s24 = sphi 0, %s31
      %s25 = sphi 0, %s23
      %s26 = sphi 0, %s24
      %s27 = sphi 0, %s25
      %s28 = sphi 0, %s26
      %s38 = sphi 0, %s40
      %s41 = sphi 0, %s38
      %s42 = sphi 0, %s41
      %s58 = sphi 0, %s42
      %s64 = sphi 0, %s66
      %s67 = sphi 0, %s64
      %s68 = sphi 0, %s67
      %s84 = sphi 0, %s68
      %s90 = sphi 0, %s92
      %s93 = sphi 0, %s90
      %s94 = sphi 0, %s93
      %s110 = sphi 0, %s94
      %s118 = sphi 0, %s120
      %s121 = sphi 0, %s118
      %s122 = sphi 0, %s121
      %s138 = sphi 0, %s122
    $region4: #{tpu_custom_call.1} parent=1 // loop_header_branch
      %19 = sbr.rel (%p17) target = $region8
    $region5: #{tpu_custom_call.1} parent=1 // loop_body
      %s21 = ssub.s32 %s16, 1
      %s22 = ssub.s32 %s16, 2
      %s29 = sadd.s32 1, %s24
      %p30 = scmp.ge.s32.totalorder %s29, 1
      %s31 = scalar_select %p30, 0, %s29
      %s32 = sadd.s32 1, %s23
      %s33 = scalar_select %p30, %s32, %s23
      %p34 = scmp.ge.s32.totalorder %s33, 2
      %s35 = scalar_select %p34, 0, %s33
      %s36 = ssub.s32 %s23, %s35
      %p37 = scmp.eq.s32.totalorder %s36, 0
      %s39 = sadd.s32 %s38, 1
      %s40 = scalar_select %p37, %s38, %s39
      %p43 = pneg %p37
      %p44 = scmp.eq.s32.totalorder %s16, 1
      %p45 = por %p43, %p44
      %p46 = scmp.ne.s32.totalorder %s38, %s41
      %p47 = scmp.eq.s32.totalorder %s16, 0
      %p48 = por %p46, %p47
      %p49 = scmp.ne.s32.totalorder %s38, %s41
      %p50 = scmp.eq.s32.totalorder %s21, 1
      %p51 = por %p49, %p50
      %p52 = scmp.ne.s32.totalorder %s41, %s42
      %p53 = scmp.eq.s32.totalorder %s21, 0
      %p54 = por %p52, %p53
      %p55 = scmp.ne.s32.totalorder %s41, %s42
      %p56 = scmp.eq.s32.totalorder %s22, 1
      %p57 = por %p55, %p56
      %p59 = scmp.ne.s32.totalorder %s42, %s58
      %p60 = scmp.eq.s32.totalorder %s22, 0
      %p61 = por %p59, %p60
      %s62 = ssub.s32 %s24, %s31
      %p63 = scmp.eq.s32.totalorder %s62, 0
      %s65 = sadd.s32 %s64, 1
      %s66 = scalar_select %p63, %s64, %s65
      %p69 = pneg %p63
      %p70 = scmp.eq.s32.totalorder %s16, 1
      %p71 = por %p69, %p70
      %p72 = scmp.ne.s32.totalorder %s64, %s67
      %p73 = scmp.eq.s32.totalorder %s16, 0
      %p74 = por %p72, %p73
      %p75 = scmp.ne.s32.totalorder %s64, %s67
      %p76 = scmp.eq.s32.totalorder %s21, 1
      %p77 = por %p75, %p76
      %p78 = scmp.ne.s32.totalorder %s67, %s68
      %p79 = scmp.eq.s32.totalorder %s21, 0
      %p80 = por %p78, %p79
      %p81 = scmp.ne.s32.totalorder %s67, %s68
      %p82 = scmp.eq.s32.totalorder %s22, 1
      %p83 = por %p81, %p82
      %p85 = scmp.ne.s32.totalorder %s68, %s84
      %p86 = scmp.eq.s32.totalorder %s22, 0
      %p87 = por %p85, %p86
      %s88 = ssub.s32 %s24, %s31
      %p89 = scmp.eq.s32.totalorder %s88, 0
      %s91 = sadd.s32 %s90, 1
      %s92 = scalar_select %p89, %s90, %s91
      %p95 = pneg %p89
      %p96 = scmp.eq.s32.totalorder %s16, 1
      %p97 = por %p95, %p96
      %p98 = scmp.ne.s32.totalorder %s90, %s93
      %p99 = scmp.eq.s32.totalorder %s16, 0
      %p100 = por %p98, %p99
      %p101 = scmp.ne.s32.totalorder %s90, %s93
      %p102 = scmp.eq.s32.totalorder %s21, 1
      %p103 = por %p101, %p102
      %p104 = scmp.ne.s32.totalorder %s93, %s94
      %p105 = scmp.eq.s32.totalorder %s21, 0
      %p106 = por %p104, %p105
      %p107 = scmp.ne.s32.totalorder %s93, %s94
      %p108 = scmp.eq.s32.totalorder %s22, 1
      %p109 = por %p107, %p108
      %p111 = scmp.ne.s32.totalorder %s94, %s110
      %p112 = scmp.eq.s32.totalorder %s22, 0
      %p113 = por %p111, %p112
      %s114 = ssub.s32 %s23, %s35
      %s115 = ssub.s32 %s24, %s31
      %s116 = sor.u32 %s114, %s115
      %p117 = scmp.eq.s32.totalorder %s116, 0
      %s119 = sadd.s32 %s118, 1
      %s120 = scalar_select %p117, %s118, %s119
      %p123 = pneg %p117
      %p124 = scmp.eq.s32.totalorder %s16, 1
      %p125 = por %p123, %p124
      %p126 = scmp.ne.s32.totalorder %s118, %s121
      %p127 = scmp.eq.s32.totalorder %s16, 0
      %p128 = por %p126, %p127
      %p129 = scmp.ne.s32.totalorder %s118, %s121
      %p130 = scmp.eq.s32.totalorder %s21, 1
      %p131 = por %p129, %p130
      %p132 = scmp.ne.s32.totalorder %s121, %s122
      %p133 = scmp.eq.s32.totalorder %s21, 0
      %p134 = por %p132, %p133
      %p135 = scmp.ne.s32.totalorder %s121, %s122
      %p136 = scmp.eq.s32.totalorder %s22, 1
      %p137 = por %p135, %p136
      %p139 = scmp.ne.s32.totalorder %s122, %s138
      %p140 = scmp.eq.s32.totalorder %s22, 0
      %p141 = por %p139, %p140
      %p142 = scmp.le.s32.totalorder 1, %s16
      %p143 = scmp.lt.s32.totalorder %s16, 3
      %p144 = pnand %p142, %p143
      %p145 = pneg %p144
      // Predicated region
      $region9: #{tpu_custom_call.1} parent=5 // pred_check
        _
      $region10: #{tpu_custom_call.1} parent=5 // pred_check_branch
        %147 = sbr.rel (%p144) target = $region12
      $region11: #{tpu_custom_call.1} parent=5 // pred_region
        %s148 = ssub.s32 %s16, 1
        // Predicated region
        $region13: #{tpu_custom_call.1} parent=11 // pred_check
          %p149 = pneg %p80
        $region14: #{tpu_custom_call.1} parent=11 // pred_check_branch
          %151 = sbr.rel (%p149) target = $region16
        $region15: #{tpu_custom_call.1} parent=11 // pred_region
          %s153 = ssub.s32 1024, 1024
          %154 = vsyncadd [#allocation6], %s153
          %s155 = smul.addr %s26, 64
          %s156 = scalar_lea.hbm %s1, %s155
          %s157 = sshll.u32 [#allocation5], 4
          %s158 = int_to_ptr.vmem [resolvable:$true] %s157
          %163 = dma.hbm_to_vmem [thread:$0]  %s156, 1024, %s158, [#allocation6], 64, 64, 4
        $region16: #{tpu_custom_call.1} parent=11 // pred_fallthru
          _
        // Predicated region
        $region17: #{tpu_custom_call.1} parent=11 // pred_check
          %p164 = pneg %p106
        $region18: #{tpu_custom_call.1} parent=11 // pred_check_branch
          %166 = sbr.rel (%p164) target = $region20
        $region19: #{tpu_custom_call.1} parent=11 // pred_region
          %p167 = scmp.lt.s32.totalorder %s26, 0
          %s168 = scalar_select %p167, %s26, 0
          %s169 = scalar_lea.vmem %s2, %s168
        $region20: #{tpu_custom_call.1} parent=11 // pred_fallthru
          _
      $region12: #{tpu_custom_call.1} parent=5 // pred_fallthru
        _
      %p170 = scmp.lt.s32.totalorder %s16, 2
      // Predicated region
      $region21: #{tpu_custom_call.1} parent=5 // pred_check
        %p171 = pneg %p170
      $region22: #{tpu_custom_call.1} parent=5 // pred_check_branch
        %173 = sbr.rel (%p171) target = $region24
      $region23: #{tpu_custom_call.1} parent=5 // pred_region
        // Predicated region
        $region25: #{tpu_custom_call.1} parent=23 // pred_check
          %p174 = pneg %p48
        $region26: #{tpu_custom_call.1} parent=23 // pred_check_branch
          %176 = sbr.rel (%p174) target = $region28
        $region27: #{tpu_custom_call.1} parent=23 // pred_region
          %s177 = sand.u32 %s38, 1
          %s178 = scalar_lea.sflag [#allocation3], %s177
          %s179 = sand.u32 %s38, 1
          %s180 = smul.addr %s179, 8
          %s181 = scalar_lea.vmem [#allocation2], %s180
          %s183 = ssub.s32 128, 128
          %184 = vsyncadd %s178, %s183
          %s185 = smul.addr %s23, 128
          %s186 = scalar_lea.hbm %s0, %s185
          %s188 = sshll.u32 %s181, 4
          %s189 = int_to_ptr.vmem [resolvable:$true] %s188
          %191 = dma.hbm_to_vmem [thread:$0]  %s186, 128, %s189, %s178
        $region28: #{tpu_custom_call.1} parent=23 // pred_fallthru
          _
      $region24: #{tpu_custom_call.1} parent=5 // pred_fallthru
        _
      %p192 = scmp.le.s32.totalorder 1, %s16
      %p193 = scmp.lt.s32.totalorder %s16, 3
      %p194 = pnand %p192, %p193
      %p195 = pneg %p194
      // Predicated region
      $region29: #{tpu_custom_call.1} parent=5 // pred_check
        _
      $region30: #{tpu_custom_call.1} parent=5 // pred_check_branch
        %197 = sbr.rel (%p194) target = $region32
      $region31: #{tpu_custom_call.1} parent=5 // pred_region
        %s198 = ssub.s32 %s16, 1
        %s199 = sand.u32 %s41, 1
        %s200 = scalar_lea.sflag [#allocation3], %s199
        %s201 = sand.u32 %s41, 1
        %s202 = smul.addr %s201, 8
        %s203 = scalar_lea.vmem [#allocation2], %s202
        // Predicated region
        $region33: #{tpu_custom_call.1} parent=31 // pred_check
          %p204 = pneg %p54
        $region34: #{tpu_custom_call.1} parent=31 // pred_check_branch
          %206 = sbr.rel (%p204) target = $region36
        $region35: #{tpu_custom_call.1} parent=31 // pred_region
          %207 = dma.done %s200, 128
        $region36: #{tpu_custom_call.1} parent=31 // pred_fallthru
          _
        // Predicated region
        $region37: #{tpu_custom_call.1} parent=31 // pred_check
          %p208 = pneg %p80
        $region38: #{tpu_custom_call.1} parent=31 // pred_check_branch
          %210 = sbr.rel (%p208) target = $region40
        $region39: #{tpu_custom_call.1} parent=31 // pred_region
          %211 = dma.done [#allocation6], 1024
        $region40: #{tpu_custom_call.1} parent=31 // pred_fallthru
          _
        %s212 = sand.u32 %s41, 1
        %s213 = scalar_lea.sflag [#allocation3], %s212
        %s214 = sand.u32 %s41, 1
        %s215 = smul.addr %s214, 8
        %s216 = scalar_lea.vmem [#allocation2], %s215
        %p217 = pneg %p54
        %p218 = pneg %p51
        %p219 = pneg %p80
        %p220 = pneg %p77
        %p221 = scmp.lt.s32.totalorder %s26, 0
        %s222 = scalar_select %p221, %s26, 0
        %s223 = scalar_lea.vmem %s2, %s222
        %p224 = pneg %p106
        %p225 = pneg %p103
        %p226 = pneg %p134
        %p227 = pneg %p131
        %s228 = sand.u32 %s121, 1
        %s229 = scalar_lea.sflag [#allocation4], %s228
        %s230 = sand.u32 %s121, 1
        %s231 = smul.addr %s230, 8
        %s232 = scalar_lea.vmem [#allocation7], %s231
        %p233 = scmp.lt.s32.totalorder %s26, 0
        %s234 = scalar_select %p233, %s26, 0
        %s235 = scalar_lea.vmem %s2, %s234
        %v237 = vld [vmem:[%s203] sm:$0xff]
        %v238 = vpack.c.bf16 %v237, %v237
        %v239 = vld [vmem:[#allocation5] sm:$0xf]
        %v240 = vld [vmem:[#allocation5 + $0x4] sm:$0xf]
        %v241 = vld [vmem:[#allocation5 + $0x8] sm:$0xf]
        %v242 = vld [vmem:[#allocation5 + $0xc] sm:$0xf]
        %v243 = vld [vmem:[#allocation5 + $0x10] sm:$0xf]
        %v244 = vld [vmem:[#allocation5 + $0x14] sm:$0xf]
        %v245 = vld [vmem:[#allocation5 + $0x18] sm:$0xf]
        %v246 = vld [vmem:[#allocation5 + $0x1c] sm:$0xf]
        %v247 = vld [vmem:[#allocation5 + $0x20] sm:$0xf]
        %v248 = vld [vmem:[#allocation5 + $0x24] sm:$0xf]
        %v249 = vld [vmem:[#allocation5 + $0x28] sm:$0xf]
        %v250 = vld [vmem:[#allocation5 + $0x2c] sm:$0xf]
        %v251 = vld [vmem:[#allocation5 + $0x30] sm:$0xf]
        %v252 = vld [vmem:[#allocation5 + $0x34] sm:$0xf]
        %v253 = vld [vmem:[#allocation5 + $0x38] sm:$0xf]
        %v254 = vld [vmem:[#allocation5 + $0x3c] sm:$0xf]
        %v255 = vld [vmem:[%s235] sm:$0x1]
        %v257 = vlaneseq
        %v258 = vshrl.u32 %v257, 7
        %v259 = vsub.s32 0, %v258
        %v260 = vrot.slane %v255, %v259
        %v278 = vunpack.c.l.b16 %v239
        %v279 = vunpack.c.l.b16 %v240
        %v280 = vunpack.c.l.b16 %v241
        %v281 = vunpack.c.l.b16 %v242
        %v282 = vunpack.c.l.b16 %v243
        %v283 = vunpack.c.l.b16 %v244
        %v284 = vunpack.c.l.b16 %v245
        %v285 = vunpack.c.l.b16 %v246
        %v286 = vunpack.c.l.b16 %v247
        %v287 = vunpack.c.l.b16 %v248
        %v288 = vunpack.c.l.b16 %v249
        %v289 = vunpack.c.l.b16 %v250
        %v290 = vunpack.c.l.b16 %v251
        %v291 = vunpack.c.l.b16 %v252
        %v292 = vunpack.c.l.b16 %v253
        %v293 = vunpack.c.l.b16 %v254
        %v294 = vpack.c.b16 %v279, %v278
        %v295 = vpack.c.b16 %v281, %v280
        %v296 = vpack.c.b16 %v283, %v282
        %v297 = vpack.c.b16 %v285, %v284
        %v298 = vpack.c.b16 %v287, %v286
        %v299 = vpack.c.b16 %v289, %v288
        %v300 = vpack.c.b16 %v291, %v290
        %v301 = vpack.c.b16 %v293, %v292
        %310 = vmatprep.subr.bf16.mxu0 0
        %311 = vmatpush1.bf16.msra.mxu0 %v294
        %312 = vmatprep.subr.bf16.mxu0 0
        %313 = vmatpush1.bf16.msra.mxu0 %v295
        %314 = vmatprep.subr.bf16.mxu0 0
        %315 = vmatpush1.bf16.msra.mxu0 %v296
        %316 = vmatprep.subr.bf16.mxu0 0
        %317 = vmatpush1.bf16.msra.mxu0 %v297
        %318 = vmatprep.subr.bf16.mxu0 0
        %319 = vmatpush1.bf16.msra.mxu0 %v298
        %320 = vmatprep.subr.bf16.mxu0 0
        %321 = vmatpush1.bf16.msra.mxu0 %v299
        %322 = vmatprep.subr.bf16.mxu0 0
        %323 = vmatpush1.bf16.msra.mxu0 %v300
        %324 = vmatprep.subr.bf16.mxu0 0
        %325 = vmatpush1.bf16.msra.mxu0 %v301
        %326 = vmatprep.subr.bf16.mxu0 0
        %327 = vmatpush1.bf16.msra.mxu0 0
        %328 = vmatprep.subr.bf16.mxu0 0
        %329 = vmatpush1.bf16.msra.mxu0 0
        %330 = vmatprep.subr.bf16.mxu0 0
        %331 = vmatpush1.bf16.msra.mxu0 0
        %332 = vmatprep.subr.bf16.mxu0 0
        %333 = vmatpush1.bf16.msra.mxu0 0
        %334 = vmatprep.subr.bf16.mxu0 0
        %335 = vmatpush1.bf16.msra.mxu0 0
        %336 = vmatprep.subr.bf16.mxu0 0
        %337 = vmatpush1.bf16.msra.mxu0 0
        %338 = vmatprep.subr.bf16.mxu0 0
        %339 = vmatpush1.bf16.msra.mxu0 0
        %340 = vmatprep.subr.bf16.mxu0 0
        %341 = vmatpush1.bf16.msra.mxu0 0
        %342 = vmatprep.mubr.bf16.mxu0 0
        %343 = vmatmul.mubr.bf16.gmra.mrb[0].mxu0 %v238
        %v344 = vpop.f32.mrb[0].mxu0
        %v345 = vadd.f32 %v260, %v344
        %v346 = vpop.f32.mrb[0].mxu0
        %v347 = vpop.f32.mrb[0].mxu0
        %v348 = vpop.f32.mrb[0].mxu0
        %349 = vdwg.mxu0
        %v350 = vmax.f32 %v345, -80.0
        %v351 = vsub.f32 0.0, %v350
        %v352 = vmul.f32 %v351, 1.442695
        %v353 = vpow.pop %v352
        %v354 = vadd.f32 %v353, 1.0
        %v355 = vrcp.pop %v354
        %v356 = vmul.f32 %v355, %v237
        %357 = vst [vmem:[%s232] sm:$0xff] %v356
        %s358 = sand.u32 %s121, 1
        %s359 = scalar_lea.sflag [#allocation4], %s358
        %s360 = sand.u32 %s121, 1
        %s361 = smul.addr %s360, 8
        %s362 = scalar_lea.vmem [#allocation7], %s361
        // Predicated region
        $region41: #{tpu_custom_call.1} parent=31 // pred_check
          %p363 = pneg %p131
        $region42: #{tpu_custom_call.1} parent=31 // pred_check_branch
          %365 = sbr.rel (%p363) target = $region44
        $region43: #{tpu_custom_call.1} parent=31 // pred_region
          %s367 = ssub.s32 128, 128
          %368 = vsyncadd %s359, %s367
          %s369 = sadd.s32 %s26, %s25
          %s370 = smul.addr %s369, 128
          %s371 = scalar_lea.hbm %s3, %s370
          %s373 = sshll.u32 %s362, 4
          %s374 = int_to_ptr.vmem [resolvable:$true] %s373
          %376 = dma.vmem_to_hbm [thread:$0]  %s374, 128, %s371, %s359
        $region44: #{tpu_custom_call.1} parent=31 // pred_fallthru
          _
      $region32: #{tpu_custom_call.1} parent=5 // pred_fallthru
        _
      %p377 = scmp.le.s32.totalorder 2, %s16
      // Predicated region
      $region45: #{tpu_custom_call.1} parent=5 // pred_check
        %p378 = pneg %p377
      $region46: #{tpu_custom_call.1} parent=5 // pred_check_branch
        %380 = sbr.rel (%p378) target = $region48
      $region47: #{tpu_custom_call.1} parent=5 // pred_region
        %s381 = ssub.s32 %s16, 2
        // Predicated region
        $region49: #{tpu_custom_call.1} parent=47 // pred_check
          %p382 = pneg %p137
        $region50: #{tpu_custom_call.1} parent=47 // pred_check_branch
          %384 = sbr.rel (%p382) target = $region52
        $region51: #{tpu_custom_call.1} parent=47 // pred_region
          %s385 = sand.u32 %s122, 1
          %s386 = scalar_lea.sflag [#allocation4], %s385
          %s387 = sand.u32 %s122, 1
          %s388 = smul.addr %s387, 8
          %s389 = scalar_lea.vmem [#allocation7], %s388
          %390 = dma.done %s386, 128
        $region52: #{tpu_custom_call.1} parent=47 // pred_fallthru
          _
      $region48: #{tpu_custom_call.1} parent=5 // pred_fallthru
        _
    $region6: #{tpu_custom_call.1} parent=1 // loop_footer
      %s20 = sadd.s32 1, %s16
    $region7: #{tpu_custom_call.1} parent=1 // loop_footer_branch
      %15 = sbr.rel target = $region3
    $region8: #{tpu_custom_call.1} parent=1 // loop_exit
      _
    %391 = vsyncpa [#allocation3], 1
    %s392 = scalar_lea.sflag [#allocation3], 1
    %393 = vsyncpa %s392, 1
    %394 = vsyncpa [#allocation6], 1
    %395 = vsyncpa [#allocation4], 1
    %s396 = scalar_lea.sflag [#allocation4], 1
    %397 = vsyncpa %s396, 1

</llo_original>
